<compile_context>
chip_gen: v5e
topology: v5e:2x2
jax: 0.10.0
libtpu: 0.0.40
codegen_flags: <defaults>
</compile_context>

<pallas_src>
import math
import functools

import jax
import jax.numpy as jnp
from jax import lax
from jax.experimental import pallas as pl
from jax.experimental.pallas import tpu as pltpu


def _query_vmem_limit():
    """Scoped-VMEM budget: ~3/4 of physical (96 MiB on 128-MiB v5e/v6e,
    48 MiB on 64-MiB v7x); conservative 32 MiB if the query is unavailable."""
    try:
        phys = int(pltpu.get_tpu_info().vmem_capacity_bytes)
        return max(32 * 1024 * 1024, min(96 * 1024 * 1024, (phys * 3) // 4))
    except Exception:
        return 32 * 1024 * 1024


_VMEM_LIMIT = _query_vmem_limit()


def _pick_tile(dim, target, quantum):
    """Largest `quantum`-multiple tile <= target that divides dim, else dim.

    TODO(synk): replace the full-dim fallback with pl.cdiv grids + remainder
    masking so odd shapes keep the tuned tile size.
    """
    if dim <= target:
        return dim
    t = (target // quantum) * quantum
    while t >= quantum:
        if dim % t == 0:
            return t
        t -= quantum
    return dim


# ----------------------------------------------------------------------------
# Kernel 1: projection to head-major layout.
#   y = x @ W + b computed with a K-tiled f32 accumulator; on the last K step
#   the (ts, D) result is scattered per-head into a head-major (B, H, S, dh)
#   output block (pure layout plumbing, once per tile, not per kv step).
# ----------------------------------------------------------------------------
def _proj_heads_kernel(x_ref, w_ref, b_ref, o_ref, acc_ref, *, head_count, dh):
    kk = pl.program_id(2)

    @pl.when(kk == 0)
    def _():
        acc_ref[...] = jnp.zeros_like(acc_ref)

    # bf16 MXU operands, f32 accumulation.
    acc_ref[...] += jnp.dot(x_ref[0].astype(jnp.bfloat16),
                            w_ref[...].astype(jnp.bfloat16),
                            preferred_element_type=jnp.float32)

    @pl.when(kk == pl.num_programs(2) - 1)
    def _():
        y = acc_ref[...] + b_ref[...]                       # (ts, D)
        for h in range(head_count):
            o_ref[0, h] = y[:, h * dh:(h + 1) * dh].astype(o_ref.dtype)


def proj_to_heads(x, w, b, head_count, *, ts_target=512, tk_target=1024,
                  out_dtype=jnp.bfloat16):
    """x: (B, S, Din), w: (Din, D), b: (1, D) -> head-major (B, H, S, dh)."""
    B, S, Din = x.shape
    D = w.shape[-1]
    dh = D // head_count
    ts = _pick_tile(S, ts_target, 8)
    tk = _pick_tile(Din, tk_target, 128)
    grid = (B, S // ts, Din // tk)
    kernel = functools.partial(_proj_heads_kernel, head_count=head_count, dh=dh)
    return pl.pallas_call(
        kernel,
        out_shape=jax.ShapeDtypeStruct((B, head_count, S, dh), out_dtype),
        grid_spec=pltpu.PrefetchScalarGridSpec(
            num_scalar_prefetch=0,
            grid=grid,
            in_specs=[
                pl.BlockSpec((1, ts, tk), lambda bb, si, ki: (bb, si, ki)),
                pl.BlockSpec((tk, D), lambda bb, si, ki: (ki, 0)),
                pl.BlockSpec((1, D), lambda bb, si, ki: (0, 0)),
            ],
            out_specs=pl.BlockSpec((1, head_count, ts, dh),
                                   lambda bb, si, ki: (bb, 0, si, 0)),
            scratch_shapes=[pltpu.VMEM((ts, D), jnp.float32)],
        ),
        compiler_params=pltpu.CompilerParams(
            dimension_semantics=("parallel", "parallel", "arbitrary"),
            vmem_limit_bytes=_VMEM_LIMIT),
    )(x, w, b)


# ----------------------------------------------------------------------------
# Kernel 2: flash attention over head-major tensors.
#   grid = (B, H, Sq/tq, Skv/tkv); per (b, h, q-tile) an online-softmax
#   (m, l, acc) accumulator lives in VMEM scratch; no in-kernel head loop,
#   every matmul is a clean (tq, dh) x (dh, tkv) / (tq, tkv) x (tkv, dh) tile.
#   The 1/sqrt(dh) scale is already folded into the Q projection weights.
# ----------------------------------------------------------------------------
def _flash_kernel(q_ref, k_ref, v_ref, o_ref, m_ref, l_ref, acc_ref):
    kv = pl.program_id(3)

    @pl.when(kv == 0)
    def _():
        m_ref[...] = jnp.full_like(m_ref, -jnp.inf)
        l_ref[...] = jnp.zeros_like(l_ref)
        acc_ref[...] = jnp.zeros_like(acc_ref)

    q = q_ref[0, 0].astype(jnp.bfloat16)       # (tq, dh)
    k = k_ref[0, 0].astype(jnp.bfloat16)       # (tkv, dh)

    # scores = q @ k^T expressed as a contraction on dh (no transpose).
    s = lax.dot_general(q, k, (((1,), (1,)), ((), ())),
                        preferred_element_type=jnp.float32)   # (tq, tkv)

    m_prev = m_ref[...]
    m_new = jnp.maximum(m_prev, jnp.max(s, axis=-1, keepdims=True))
    alpha = jnp.exp(m_prev - m_new)
    p = jnp.exp(s - m_new)
    l_ref[...] = alpha * l_ref[...] + jnp.sum(p, axis=-1, keepdims=True)
    acc_ref[...] = alpha * acc_ref[...] + jnp.dot(
        p.astype(jnp.bfloat16), v_ref[0, 0].astype(jnp.bfloat16),
        preferred_element_type=jnp.float32)
    m_ref[...] = m_new

    @pl.when(kv == pl.num_programs(3) - 1)
    def _():
        # Exact reciprocal: runs once per q-tile, restores tight accuracy.
        o_ref[0, 0] = (acc_ref[...] *
                       pl.reciprocal(l_ref[...], approx=False)
                       ).astype(o_ref.dtype)


def flash_attention(q, k, v, *, tq_target=512, tkv_target=1024):
    """q: (B, H, Sq, dh), k/v: (B, H, Skv, dh) -> context (B, H, Sq, dh)."""
    B, H, Sq, dh = q.shape
    Skv = k.shape[2]
    tq = _pick_tile(Sq, tq_target, 8)
    tkv = _pick_tile(Skv, tkv_target, 8)
    grid = (B, H, Sq // tq, Skv // tkv)
    return pl.pallas_call(
        _flash_kernel,
        out_shape=jax.ShapeDtypeStruct((B, H, Sq, dh), q.dtype),
        grid_spec=pltpu.PrefetchScalarGridSpec(
            num_scalar_prefetch=0,
            grid=grid,
            in_specs=[
                pl.BlockSpec((1, 1, tq, dh),
                             lambda b, h, qi, ki: (b, h, qi, 0)),
                pl.BlockSpec((1, 1, tkv, dh),
                             lambda b, h, qi, ki: (b, h, ki, 0)),
                pl.BlockSpec((1, 1, tkv, dh),
                             lambda b, h, qi, ki: (b, h, ki, 0)),
            ],
            out_specs=pl.BlockSpec((1, 1, tq, dh),
                                   lambda b, h, qi, ki: (b, h, qi, 0)),
            scratch_shapes=[
                pltpu.VMEM((tq, 1), jnp.float32),     # running max
                pltpu.VMEM((tq, 1), jnp.float32),     # running denom
                pltpu.VMEM((tq, dh), jnp.float32),    # running context
            ],
        ),
        compiler_params=pltpu.CompilerParams(
            dimension_semantics=("parallel", "parallel", "parallel",
                                 "arbitrary"),
            vmem_limit_bytes=_VMEM_LIMIT),
    )(q, k, v)


# ----------------------------------------------------------------------------
# Kernel 3: output projection consuming the head-major context.
#   Heads are the reduction axis: out = bo + sum_h ctx_h @ Wo[h*dh:(h+1)*dh],
#   so the PyTorch "unshape" transpose/concat never materializes.
# ----------------------------------------------------------------------------
def _out_proj_kernel(ctx_ref, w_ref, b_ref, o_ref, *, head_count, dh):
    acc = jnp.zeros(o_ref.shape[1:], jnp.float32) + b_ref[...]
    for h in range(head_count):
        acc = acc + jnp.dot(
            ctx_ref[0, h].astype(jnp.bfloat16),
            w_ref[h * dh:(h + 1) * dh, :].astype(jnp.bfloat16),
            preferred_element_type=jnp.float32)
    o_ref[0] = acc.astype(o_ref.dtype)


def output_projection(ctx, w, b, *, ts_target=512, out_dtype=jnp.float32):
    """ctx: (B, H, S, dh) head-major, w: (D, D), b: (1, D) -> (B, S, D)."""
    B, H, S, dh = ctx.shape
    D = w.shape[-1]
    ts = _pick_tile(S, ts_target, 8)
    grid = (B, S // ts)
    kernel = functools.partial(_out_proj_kernel, head_count=H, dh=dh)
    return pl.pallas_call(
        kernel,
        out_shape=jax.ShapeDtypeStruct((B, S, D), out_dtype),
        grid_spec=pltpu.PrefetchScalarGridSpec(
            num_scalar_prefetch=0,
            grid=grid,
            in_specs=[
                pl.BlockSpec((1, H, ts, dh), lambda bb, si: (bb, 0, si, 0)),
                pl.BlockSpec((H * dh, D), lambda bb, si: (0, 0)),
                pl.BlockSpec((1, D), lambda bb, si: (0, 0)),
            ],
            out_specs=pl.BlockSpec((1, ts, D), lambda bb, si: (bb, si, 0)),
        ),
        compiler_params=pltpu.CompilerParams(
            dimension_semantics=("parallel", "parallel"),
            vmem_limit_bytes=_VMEM_LIMIT),
    )(ctx, w, b)


# ----------------------------------------------------------------------------
# Full module forward
# ----------------------------------------------------------------------------
def prepare_params(params, head_count):
    """One-time parameter prep (outside the per-call forward path): fold the
    1/sqrt(dh) query scale into Wq/bq and reshape biases to (1, D)."""
    D = params["wq"].shape[0]
    dh = D // head_count
    scale = 1.0 / math.sqrt(dh)
    return {
        "wq": params["wq"] * scale,
        "bq": (params["bq"] * scale).reshape(1, D),
        "wk": params["wk"], "bk": params["bk"].reshape(1, D),
        "wv": params["wv"], "bv": params["bv"].reshape(1, D),
        "wo": params["wo"], "bo": params["bo"].reshape(1, D),
    }


def multi_headed_attention_forward(prepared, key, value, query, head_count):
    """key/value: (B, Skv, D), query: (B, Sq, D) -> (B, Sq, D)."""
    q = proj_to_heads(query, prepared["wq"], prepared["bq"], head_count)
    k = proj_to_heads(key, prepared["wk"], prepared["bk"], head_count)
    v = proj_to_heads(value, prepared["wv"], prepared["bv"], head_count)
    ctx = flash_attention(q, k, v)                      # (B, H, Sq, dh)
    return output_projection(ctx, prepared["wo"], prepared["bo"])


# ----------------------------------------------------------------------------
# Deterministic parameter init (nn.Linear shapes; stored as (Din, Dout))
# ----------------------------------------------------------------------------
def init_params(rng, model_dim):
    bound = 1.0 / math.sqrt(model_dim)
    keys = jax.random.split(rng, 8)

    def w(kk):
        return jax.random.uniform(kk, (model_dim, model_dim), jnp.float32,
                                  -bound, bound)

    def b(kk):
        return jax.random.uniform(kk, (model_dim,), jnp.float32, -bound, bound)

    return {
        "wk": w(keys[0]), "bk": b(keys[1]),
        "wv": w(keys[2]), "bv": b(keys[3]),
        "wq": w(keys[4]), "bq": b(keys[5]),
        "wo": w(keys[6]), "bo": b(keys[7]),
    }


if __name__ == "__main__":
    head_count = 4
    model_dim = 32     # dim_per_head = 8
    batch = 2
    seq = 8

    root = jax.random.PRNGKey(0)
    k_params, k_key, k_val, k_qry = jax.random.split(root, 4)

    params = init_params(k_params, model_dim)
    prepared = prepare_params(params, head_count)

    key_in = jax.random.normal(k_key, (batch, seq, model_dim), jnp.float32)
    value_in = jax.random.normal(k_val, (batch, seq, model_dim), jnp.float32)
    query_in = jax.random.normal(k_qry, (batch, seq, model_dim), jnp.float32)

    out = multi_headed_attention_forward(prepared, key_in, value_in, query_in,
                                         head_count)
    out = jax.block_until_ready(out)

    # Pure-JAX f32 reference (same math, no Pallas).
    def ref_forward(params, key, value, query):
        B, S, D = query.shape
        dh = D // head_count

        def proj(x, w, b):
            y = x.reshape(B * S, D) @ w + b
            return y.reshape(B, S, head_count, dh).transpose(0, 2, 1, 3)

        k = proj(key, params["wk"], params["bk"])
        v = proj(value, params["wv"], params["bv"])
        q = proj(query, params["wq"], params["bq"]) / math.sqrt(dh)
        scores = jnp.einsum("bhqd,bhkd->bhqk", q, k)
        attn = jax.nn.softmax(scores, axis=-1)
        ctx = jnp.einsum("bhqk,bhkd->bhqd", attn, v)
        ctx = ctx.transpose(0, 2, 1, 3).reshape(B * S, D)
        return (ctx @ params["wo"] + params["bo"]).reshape(B, S, D)

    ref = ref_forward(params, key_in, value_in, query_in)
    # Tolerance reflects bf16 MXU operands + bf16 intermediate activations
    # (f32 accumulation throughout); errors are at the ~1e-2 level.
    assert jnp.allclose(out, ref, atol=5e-2, rtol=5e-2), "mismatch vs reference"

    print("KERNEL_OK")
</pallas_src>

<mosaic_0001>
module attributes {stable_mosaic.version = 11 : i64} {
  func.func @_proj_heads_kernel(%arg0: i32, %arg1: i32, %arg2: i32, %arg3: memref<1x8x32xf32, #tpu.memory_space<vmem>>, %arg4: memref<32x32xf32, #tpu.memory_space<vmem>>, %arg5: memref<1x32xf32, #tpu.memory_space<vmem>>, %arg6: memref<1x4x8x8xbf16, #tpu.memory_space<vmem>>, %arg7: memref<8x32xf32, #tpu.memory_space<vmem>>) attributes {dimension_semantics = [#tpu.dimension_semantics<parallel>, #tpu.dimension_semantics<parallel>, #tpu.dimension_semantics<arbitrary>], iteration_bounds = array<i64: 2, 1, 1>, scalar_prefetch = 0 : i64, scratch_operands = 1 : i64, tpu.core_type = #tpu.core_type<tc>, window_params = [{transform_indices = @transform_0, window_bounds = array<i64: 1, 8, 32>}, {transform_indices = @transform_1, window_bounds = array<i64: 32, 32>}, {pipeline_mode = #tpu.pipeline_mode<synchronous>, transform_indices = @transform_2, window_bounds = array<i64: 1, 32>}, {transform_indices = @transform_3, window_bounds = array<i64: 1, 4, 8, 8>}]} {
    %c0_i32 = arith.constant 0 : i32
    %0 = arith.cmpi eq, %arg2, %c0_i32 : i32
    %1 = arith.extui %0 : i1 to i32
    %c0_i32_0 = arith.constant 0 : i32
    %2 = arith.cmpi ne, %1, %c0_i32_0 : i32
    scf.if %2 {
      %cst_11 = arith.constant 0.000000e+00 : f32
      %15 = vector.broadcast %cst_11 : f32 to vector<8x32xf32>
      %c0_12 = arith.constant 0 : index
      %c0_13 = arith.constant 0 : index
      %16 = vector.load %arg7[%c0_12, %c0_13] : memref<8x32xf32, #tpu.memory_space<vmem>>, vector<8x32xf32>
      tpu.vector_store %arg7[%c0_12, %c0_13], %15 {strides = array<i32>} : memref<8x32xf32, #tpu.memory_space<vmem>>, vector<8x32xf32>,
    } else {
    }
    %c0 = arith.constant 0 : index
    %c0_1 = arith.constant 0 : index
    %3 = vector.load %arg7[%c0, %c0_1] : memref<8x32xf32, #tpu.memory_space<vmem>>, vector<8x32xf32>
    %c0_2 = arith.constant 0 : index
    %c0_3 = arith.constant 0 : index
    %c0_4 = arith.constant 0 : index
    %4 = vector.load %arg3[%c0_2, %c0_3, %c0_4] : memref<1x8x32xf32, #tpu.memory_space<vmem>>, vector<1x8x32xf32>
    %5 = vector.shape_cast %4 : vector<1x8x32xf32> to vector<8x32xf32>
    %6 = arith.truncf %5 : vector<8x32xf32> to vector<8x32xbf16>
    %c0_5 = arith.constant 0 : index
    %c0_6 = arith.constant 0 : index
    %7 = vector.load %arg4[%c0_5, %c0_6] : memref<32x32xf32, #tpu.memory_space<vmem>>, vector<32x32xf32>
    %8 = arith.truncf %7 : vector<32x32xf32> to vector<32x32xbf16>
    %cst = arith.constant dense<0.000000e+00> : vector<8x32xf32>
    %9 = tpu.matmul %6, %8, %cst {dimension_numbers = #tpu.dot_dimension_numbers<[1], [0], [0], [1], [0, 0, 1, 1], [], []>} : vector<8x32xbf16>, vector<32x32xbf16>, vector<8x32xf32> -> vector<8x32xf32>
    %10 = arith.addf %3, %9 : vector<8x32xf32>
    %c0_7 = arith.constant 0 : index
    %c0_8 = arith.constant 0 : index
    %11 = vector.load %arg7[%c0_7, %c0_8] : memref<8x32xf32, #tpu.memory_space<vmem>>, vector<8x32xf32>
    tpu.vector_store %arg7[%c0_7, %c0_8], %10 {strides = array<i32>} : memref<8x32xf32, #tpu.memory_space<vmem>>, vector<8x32xf32>,
    %c0_i32_9 = arith.constant 0 : i32
    %12 = arith.cmpi eq, %arg2, %c0_i32_9 : i32
    %13 = arith.extui %12 : i1 to i32
    %c0_i32_10 = arith.constant 0 : i32
    %14 = arith.cmpi ne, %13, %c0_i32_10 : i32
    scf.if %14 {
      %c0_11 = arith.constant 0 : index
      %c0_12 = arith.constant 0 : index
      %15 = vector.load %arg7[%c0_11, %c0_12] : memref<8x32xf32, #tpu.memory_space<vmem>>, vector<8x32xf32>
      %c0_13 = arith.constant 0 : index
      %c0_14 = arith.constant 0 : index
      %16 = vector.load %arg5[%c0_13, %c0_14] : memref<1x32xf32, #tpu.memory_space<vmem>>, vector<1x32xf32>
      %17 = vector.broadcast %16 : vector<1x32xf32> to vector<8x32xf32>
      %18 = arith.addf %15, %17 : vector<8x32xf32>
      %19 = vector.extract_strided_slice %18 {offsets = [0, 0], sizes = [8, 8], strides = [1, 1]} : vector<8x32xf32> to vector<8x8xf32>
      %20 = arith.truncf %19 : vector<8x8xf32> to vector<8x8xbf16>
      %c0_15 = arith.constant 0 : index
      %c0_16 = arith.constant 0 : index
      %c0_17 = arith.constant 0 : index
      %c0_18 = arith.constant 0 : index
      %21 = vector.load %arg6[%c0_15, %c0_16, %c0_17, %c0_18] : memref<1x4x8x8xbf16, #tpu.memory_space<vmem>>, vector<1x1x8x8xbf16>
      %22 = vector.shape_cast %21 : vector<1x1x8x8xbf16> to vector<8x8xbf16>
      %23 = vector.shape_cast %20 : vector<8x8xbf16> to vector<1x1x8x8xbf16>
      tpu.vector_store %arg6[%c0_15, %c0_16, %c0_17, %c0_18], %23 {strides = array<i32>} : memref<1x4x8x8xbf16, #tpu.memory_space<vmem>>, vector<1x1x8x8xbf16>,
      %24 = vector.extract_strided_slice %18 {offsets = [0, 8], sizes = [8, 8], strides = [1, 1]} : vector<8x32xf32> to vector<8x8xf32>
      %25 = arith.truncf %24 : vector<8x8xf32> to vector<8x8xbf16>
      %c0_19 = arith.constant 0 : index
      %c1 = arith.constant 1 : index
      %c0_20 = arith.constant 0 : index
      %c0_21 = arith.constant 0 : index
      %26 = vector.load %arg6[%c0_19, %c1, %c0_20, %c0_21] : memref<1x4x8x8xbf16, #tpu.memory_space<vmem>>, vector<1x1x8x8xbf16>
      %27 = vector.shape_cast %26 : vector<1x1x8x8xbf16> to vector<8x8xbf16>
      %28 = vector.shape_cast %25 : vector<8x8xbf16> to vector<1x1x8x8xbf16>
      tpu.vector_store %arg6[%c0_19, %c1, %c0_20, %c0_21], %28 {strides = array<i32>} : memref<1x4x8x8xbf16, #tpu.memory_space<vmem>>, vector<1x1x8x8xbf16>,
      %29 = vector.extract_strided_slice %18 {offsets = [0, 16], sizes = [8, 8], strides = [1, 1]} : vector<8x32xf32> to vector<8x8xf32>
      %30 = arith.truncf %29 : vector<8x8xf32> to vector<8x8xbf16>
      %c0_22 = arith.constant 0 : index
      %c2 = arith.constant 2 : index
      %c0_23 = arith.constant 0 : index
      %c0_24 = arith.constant 0 : index
      %31 = vector.load %arg6[%c0_22, %c2, %c0_23, %c0_24] : memref<1x4x8x8xbf16, #tpu.memory_space<vmem>>, vector<1x1x8x8xbf16>
      %32 = vector.shape_cast %31 : vector<1x1x8x8xbf16> to vector<8x8xbf16>
      %33 = vector.shape_cast %30 : vector<8x8xbf16> to vector<1x1x8x8xbf16>
      tpu.vector_store %arg6[%c0_22, %c2, %c0_23, %c0_24], %33 {strides = array<i32>} : memref<1x4x8x8xbf16, #tpu.memory_space<vmem>>, vector<1x1x8x8xbf16>,
      %34 = vector.extract_strided_slice %18 {offsets = [0, 24], sizes = [8, 8], strides = [1, 1]} : vector<8x32xf32> to vector<8x8xf32>
      %35 = arith.truncf %34 : vector<8x8xf32> to vector<8x8xbf16>
      %c0_25 = arith.constant 0 : index
      %c3 = arith.constant 3 : index
      %c0_26 = arith.constant 0 : index
      %c0_27 = arith.constant 0 : index
      %36 = vector.load %arg6[%c0_25, %c3, %c0_26, %c0_27] : memref<1x4x8x8xbf16, #tpu.memory_space<vmem>>, vector<1x1x8x8xbf16>
      %37 = vector.shape_cast %36 : vector<1x1x8x8xbf16> to vector<8x8xbf16>
      %38 = vector.shape_cast %35 : vector<8x8xbf16> to vector<1x1x8x8xbf16>
      tpu.vector_store %arg6[%c0_25, %c3, %c0_26, %c0_27], %38 {strides = array<i32>} : memref<1x4x8x8xbf16, #tpu.memory_space<vmem>>, vector<1x1x8x8xbf16>,
    } else {
    }
    return
  }
  func.func @transform_0(%arg0: i32, %arg1: i32, %arg2: i32) -> (i32, i32, i32) {
    %c0_i32 = arith.constant 0 : i32
    return %arg0, %arg1, %arg2 : i32, i32, i32
  }
  func.func @transform_1(%arg0: i32, %arg1: i32, %arg2: i32) -> (i32, i32) {
    %c0_i32 = arith.constant 0 : i32
    %c0_i32_0 = arith.constant 0 : i32
    return %arg2, %c0_i32 : i32, i32
  }
  func.func @transform_2(%arg0: i32, %arg1: i32, %arg2: i32) -> (i32, i32) {
    %c0_i32 = arith.constant 0 : i32
    %c0_i32_0 = arith.constant 0 : i32
    %c0_i32_1 = arith.constant 0 : i32
    return %c0_i32, %c0_i32_0 : i32, i32
  }
  func.func @transform_3(%arg0: i32, %arg1: i32, %arg2: i32) -> (i32, i32, i32, i32) {
    %c0_i32 = arith.constant 0 : i32
    %c0_i32_0 = arith.constant 0 : i32
    %c0_i32_1 = arith.constant 0 : i32
    return %arg0, %c0_i32, %arg1, %c0_i32_0 : i32, i32, i32, i32
  }
}

</mosaic_0001>

<llo_original>
// kernel: tpu_custom_call.1
$region0: #{tpu_custom_call.1}
  #allocation0 [shape = 'u32[]', space=smem, size = 0x4, offset = 0x4, fixed_abs, tag = 'smem constant byte address 0x4 - core index']
  #allocation1 [shape = 'u32[72,128]{1,0:T(1,128)}', space=vmem, size = 0x9000, scoped, tag = 'internal scratch']
  #allocation2 [shape = 'f32[8,32]{1,0:T(8,128)}', space=vmem, size = 0x1000, scoped, tag = 'scratch operand']
  %s0 = inlined_call_operand.hbm [shape: f32[2,8,32], index: 0, kind: input, shape index: {}]
  %s1 = inlined_call_operand.hbm [shape: f32[32,32], index: 1, kind: input, shape index: {}]
  %s2 = inlined_call_operand.vmem [shape: f32[1,32], index: 2, kind: input, shape index: {}]
  %s3 = inlined_call_operand.hbm [shape: bf16[2,4,8,8], index: 3, kind: output, shape index: {}]
  %s4 = sld [smem:[#allocation0]]
  $region61: #{tpu_custom_call.1} parent=0
    _
  %s6 = ssub.s32 1, %s4
  %s7 = scalar_select 0, %s6, %s4
  $region1: #{tpu_custom_call.1} parent=0
    #allocation3 [shape = 'u8[8192]{0}', space=vmem, size = 0x2000, scoped, tag = 'input window, operand 0']
    #allocation4 [shape = 's32[2]{0}', space=sflag, size = 0x8, scoped, tag = 'scoped memory for tpu_custom_call.1']
    #allocation5 [shape = 's32[2]{0}', space=sflag, size = 0x8, scoped, tag = 'scoped memory for tpu_custom_call.1']
    #allocation6 [shape = 'u8[16384]{0}', space=vmem, size = 0x4000, scoped, tag = 'input window, operand 1, single buffered']
    #allocation7 [shape = 's32[1]{0}', space=sflag, size = 0x4, scoped, tag = 'scoped memory for tpu_custom_call.1']
    #allocation8 [shape = 'u8[16384]{0}', space=vmem, size = 0x4000, scoped, tag = 'output window, operand 0']
    %8 = vsyncpa [#allocation4], 0
    %s9 = scalar_lea.sflag [#allocation4], 1
    %10 = vsyncpa %s9, 0
    %11 = vsyncpa [#allocation7], 0
    %12 = vsyncpa [#allocation5], 0
    %s13 = scalar_lea.sflag [#allocation5], 1
    %14 = vsyncpa %s13, 0
    loop: start=0, step=1, limit=4
    $region2: #{tpu_custom_call.1} parent=1 // loop_pre_header
      _
    $region3: #{tpu_custom_call.1} parent=1 // loop_header
      %s16 = sphi 0, %s20
      %p17 = scmp.ge.s32.totalorder %s16, 4
      %s23 = sphi 0, %s42
      %s24 = sphi 0, %s38
      %s25 = sphi 0, %s34
      %s26 = sphi 0, %s23
      %s27 = sphi 0, %s24
      %s28 = sphi 0, %s25
      %s29 = sphi 0, %s26
      %s30 = sphi 0, %s27
      %s31 = sphi 0, %s28
      %s49 = sphi 0, %s51
      %s52 = sphi 0, %s49
      %s53 = sphi 0, %s52
      %s69 = sphi 0, %s53
      %s75 = sphi 0, %s77
      %s78 = sphi 0, %s75
      %s79 = sphi 0, %s78
      %s95 = sphi 0, %s79
      %s99 = sphi 0, %s99
      %s101 = sphi 0, %s99
      %s102 = sphi 0, %s101
      %s116 = sphi 0, %s102
      %s124 = sphi 0, %s126
      %s127 = sphi 0, %s124
      %s128 = sphi 0, %s127
      %s144 = sphi 0, %s128
    $region4: #{tpu_custom_call.1} parent=1 // loop_header_branch
      %19 = sbr.rel (%p17) target = $region8
    $region5: #{tpu_custom_call.1} parent=1 // loop_body
      %s21 = ssub.s32 %s16, 1
      %s22 = ssub.s32 %s16, 2
      %s32 = sadd.s32 1, %s25
      %p33 = scmp.ge.s32.totalorder %s32, 1
      %s34 = scalar_select %p33, 0, %s32
      %s35 = sadd.s32 1, %s24
      %s36 = scalar_select %p33, %s35, %s24
      %p37 = scmp.ge.s32.totalorder %s36, 1
      %s38 = scalar_select %p37, 0, %s36
      %s39 = sadd.s32 1, %s23
      %s40 = scalar_select %p37, %s39, %s23
      %p41 = scmp.ge.s32.totalorder %s40, 2
      %s42 = scalar_select %p41, 0, %s40
      %s43 = ssub.s32 %s23, %s42
      %s44 = ssub.s32 %s24, %s38
      %s45 = sor.u32 %s43, %s44
      %s46 = ssub.s32 %s25, %s34
      %s47 = sor.u32 %s45, %s46
      %p48 = scmp.eq.s32.totalorder %s47, 0
      %s50 = sadd.s32 %s49, 1
      %s51 = scalar_select %p48, %s49, %s50
      %p54 = pneg %p48
      %p55 = scmp.eq.s32.totalorder %s16, 1
      %p56 = por %p54, %p55
      %p57 = scmp.ne.s32.totalorder %s49, %s52
      %p58 = scmp.eq.s32.totalorder %s16, 0
      %p59 = por %p57, %p58
      %p60 = scmp.ne.s32.totalorder %s49, %s52
      %p61 = scmp.eq.s32.totalorder %s21, 1
      %p62 = por %p60, %p61
      %p63 = scmp.ne.s32.totalorder %s52, %s53
      %p64 = scmp.eq.s32.totalorder %s21, 0
      %p65 = por %p63, %p64
      %p66 = scmp.ne.s32.totalorder %s52, %s53
      %p67 = scmp.eq.s32.totalorder %s22, 1
      %p68 = por %p66, %p67
      %p70 = scmp.ne.s32.totalorder %s53, %s69
      %p71 = scmp.eq.s32.totalorder %s22, 0
      %p72 = por %p70, %p71
      %s73 = ssub.s32 %s25, %s34
      %p74 = scmp.eq.s32.totalorder %s73, 0
      %s76 = sadd.s32 %s75, 1
      %s77 = scalar_select %p74, %s75, %s76
      %p80 = pneg %p74
      %p81 = scmp.eq.s32.totalorder %s16, 1
      %p82 = por %p80, %p81
      %p83 = scmp.ne.s32.totalorder %s75, %s78
      %p84 = scmp.eq.s32.totalorder %s16, 0
      %p85 = por %p83, %p84
      %p86 = scmp.ne.s32.totalorder %s75, %s78
      %p87 = scmp.eq.s32.totalorder %s21, 1
      %p88 = por %p86, %p87
      %p89 = scmp.ne.s32.totalorder %s78, %s79
      %p90 = scmp.eq.s32.totalorder %s21, 0
      %p91 = por %p89, %p90
      %p92 = scmp.ne.s32.totalorder %s78, %s79
      %p93 = scmp.eq.s32.totalorder %s22, 1
      %p94 = por %p92, %p93
      %p96 = scmp.ne.s32.totalorder %s79, %s95
      %p97 = scmp.eq.s32.totalorder %s22, 0
      %p98 = por %p96, %p97
      %s100 = sadd.s32 %s99, 1
      %p103 = scmp.eq.s32.totalorder %s16, 1
      %p104 = scmp.ne.s32.totalorder %s99, %s101
      %p105 = scmp.eq.s32.totalorder %s16, 0
      %p106 = por %p104, %p105
      %p107 = scmp.ne.s32.totalorder %s99, %s101
      %p108 = scmp.eq.s32.totalorder %s21, 1
      %p109 = por %p107, %p108
      %p110 = scmp.ne.s32.totalorder %s101, %s102
      %p111 = scmp.eq.s32.totalorder %s21, 0
      %p112 = por %p110, %p111
      %p113 = scmp.ne.s32.totalorder %s101, %s102
      %p114 = scmp.eq.s32.totalorder %s22, 1
      %p115 = por %p113, %p114
      %p117 = scmp.ne.s32.totalorder %s102, %s116
      %p118 = scmp.eq.s32.totalorder %s22, 0
      %p119 = por %p117, %p118
      %s120 = ssub.s32 %s23, %s42
      %s121 = ssub.s32 %s24, %s38
      %s122 = sor.u32 %s120, %s121
      %p123 = scmp.eq.s32.totalorder %s122, 0
      %s125 = sadd.s32 %s124, 1
      %s126 = scalar_select %p123, %s124, %s125
      %p129 = pneg %p123
      %p130 = scmp.eq.s32.totalorder %s16, 1
      %p131 = por %p129, %p130
      %p132 = scmp.ne.s32.totalorder %s124, %s127
      %p133 = scmp.eq.s32.totalorder %s16, 0
      %p134 = por %p132, %p133
      %p135 = scmp.ne.s32.totalorder %s124, %s127
      %p136 = scmp.eq.s32.totalorder %s21, 1
      %p137 = por %p135, %p136
      %p138 = scmp.ne.s32.totalorder %s127, %s128
      %p139 = scmp.eq.s32.totalorder %s21, 0
      %p140 = por %p138, %p139
      %p141 = scmp.ne.s32.totalorder %s127, %s128
      %p142 = scmp.eq.s32.totalorder %s22, 1
      %p143 = por %p141, %p142
      %p145 = scmp.ne.s32.totalorder %s128, %s144
      %p146 = scmp.eq.s32.totalorder %s22, 0
      %p147 = por %p145, %p146
      %p148 = scmp.le.s32.totalorder 1, %s16
      %p149 = scmp.lt.s32.totalorder %s16, 3
      %p150 = pnand %p148, %p149
      %p151 = pneg %p150
      // Predicated region
      $region9: #{tpu_custom_call.1} parent=5 // pred_check
        _
      $region10: #{tpu_custom_call.1} parent=5 // pred_check_branch
        %153 = sbr.rel (%p150) target = $region12
      $region11: #{tpu_custom_call.1} parent=5 // pred_region
        %s154 = ssub.s32 %s16, 1
        // Predicated region
        $region13: #{tpu_custom_call.1} parent=11 // pred_check
          %p155 = pneg %p91
        $region14: #{tpu_custom_call.1} parent=11 // pred_check_branch
          %157 = sbr.rel (%p155) target = $region16
        $region15: #{tpu_custom_call.1} parent=11 // pred_region
          %s158 = smul.u32 4, %s28
          %160 = vsyncadd [#allocation7], 0
          %s161 = smul.addr %s158, 8
          %s162 = scalar_lea.hbm %s1, %s161
          %s163 = sshll.u32 %s162, 4
          %s164 = int_to_ptr.hbm [resolvable:$true] %s163
          %s165 = sshll.u32 [#allocation6], 4
          %s166 = int_to_ptr.vmem [resolvable:$true] %s165
          %171 = dma.hbm_to_vmem [thread:$0]  %s164, 512, %s166, [#allocation7], 128, 128, 8
        $region16: #{tpu_custom_call.1} parent=11 // pred_fallthru
          _
        // Predicated region
        $region17: #{tpu_custom_call.1} parent=11 // pred_check
          %p172 = pneg %p112
        $region18: #{tpu_custom_call.1} parent=11 // pred_check_branch
          %174 = sbr.rel (%p172) target = $region20
        $region19: #{tpu_custom_call.1} parent=11 // pred_region
          _
        $region20: #{tpu_custom_call.1} parent=11 // pred_fallthru
          _
      $region12: #{tpu_custom_call.1} parent=5 // pred_fallthru
        _
      %p175 = scmp.lt.s32.totalorder %s16, 2
      // Predicated region
      $region21: #{tpu_custom_call.1} parent=5 // pred_check
        %p176 = pneg %p175
      $region22: #{tpu_custom_call.1} parent=5 // pred_check_branch
        %178 = sbr.rel (%p176) target = $region24
      $region23: #{tpu_custom_call.1} parent=5 // pred_region
        // Predicated region
        $region25: #{tpu_custom_call.1} parent=23 // pred_check
          %p179 = pneg %p59
        $region26: #{tpu_custom_call.1} parent=23 // pred_check_branch
          %181 = sbr.rel (%p179) target = $region28
        $region27: #{tpu_custom_call.1} parent=23 // pred_region
          %s182 = sand.u32 %s49, 1
          %s183 = scalar_lea.sflag [#allocation4], %s182
          %s184 = sand.u32 %s49, 1
          %s185 = smul.addr %s184, 8
          %s186 = scalar_lea.vmem [#allocation3], %s185
          %188 = vsyncadd %s183, 0
          %s189 = sadd.s32 %s25, %s24
          %s190 = sadd.s32 %s189, %s23
          %s191 = smul.addr %s190, 8
          %s192 = scalar_lea.hbm %s0, %s191
          %s194 = sshll.u32 %s192, 4
          %s195 = int_to_ptr.hbm [resolvable:$true] %s194
          %s196 = sshll.u32 %s186, 4
          %s197 = int_to_ptr.vmem [resolvable:$true] %s196
          %199 = dma.hbm_to_vmem [thread:$0]  %s195, 128, %s197, %s183
        $region28: #{tpu_custom_call.1} parent=23 // pred_fallthru
          _
      $region24: #{tpu_custom_call.1} parent=5 // pred_fallthru
        _
      %p200 = scmp.le.s32.totalorder 1, %s16
      %p201 = scmp.lt.s32.totalorder %s16, 3
      %p202 = pnand %p200, %p201
      %p203 = pneg %p202
      // Predicated region
      $region29: #{tpu_custom_call.1} parent=5 // pred_check
        _
      $region30: #{tpu_custom_call.1} parent=5 // pred_check_branch
        %205 = sbr.rel (%p202) target = $region32
      $region31: #{tpu_custom_call.1} parent=5 // pred_region
        %s206 = ssub.s32 %s16, 1
        %s207 = sand.u32 %s52, 1
        %s208 = scalar_lea.sflag [#allocation4], %s207
        %s209 = sand.u32 %s52, 1
        %s210 = smul.addr %s209, 8
        %s211 = scalar_lea.vmem [#allocation3], %s210
        // Predicated region
        $region33: #{tpu_custom_call.1} parent=31 // pred_check
          %p212 = pneg %p65
        $region34: #{tpu_custom_call.1} parent=31 // pred_check_branch
          %214 = sbr.rel (%p212) target = $region36
        $region35: #{tpu_custom_call.1} parent=31 // pred_region
          %216 = dma.done %s208, 128
        $region36: #{tpu_custom_call.1} parent=31 // pred_fallthru
          _
        // Predicated region
        $region37: #{tpu_custom_call.1} parent=31 // pred_check
          %p217 = pneg %p91
        $region38: #{tpu_custom_call.1} parent=31 // pred_check_branch
          %219 = sbr.rel (%p217) target = $region40
        $region39: #{tpu_custom_call.1} parent=31 // pred_region
          %221 = dma.done [#allocation7], 512
        $region40: #{tpu_custom_call.1} parent=31 // pred_fallthru
          _
        %s222 = sand.u32 %s52, 1
        %s223 = scalar_lea.sflag [#allocation4], %s222
        %s224 = sand.u32 %s52, 1
        %s225 = smul.addr %s224, 8
        %s226 = scalar_lea.vmem [#allocation3], %s225
        %p227 = pneg %p65
        %p228 = pneg %p62
        %p229 = pneg %p91
        %p230 = pneg %p88
        %p231 = pneg %p112
        %p232 = pneg %p109
        %p233 = pneg %p140
        %p234 = pneg %p137
        %s235 = sand.u32 %s127, 1
        %s236 = scalar_lea.sflag [#allocation5], %s235
        %s237 = sand.u32 %s127, 1
        %s238 = smul.addr %s237, 16
        %s239 = scalar_lea.vmem [#allocation8], %s238
        %s240 = smul.u32 4, %s28
        %p242 = scmp.eq.s32.totalorder %s28, 0
        // Predicated region
        $region41: #{tpu_custom_call.1} parent=31 // pred_check
          %p243 = pneg %p242
        $region42: #{tpu_custom_call.1} parent=31 // pred_check_branch
          %245 = sbr.rel (%p243) target = $region44
        $region43: #{tpu_custom_call.1} parent=31 // pred_region
          %vm246 = vcmask 261120
          %247 = vst.msk [vmem:[#allocation2] sm:$0xff] %vm246, 0.0
        $region44: #{tpu_custom_call.1} parent=31 // pred_fallthru
          _
        %v248 = vld [vmem:[#allocation2] sm:$0xff]
        %v249 = vld [vmem:[%s211] sm:$0xff]
        %v250 = vpack.c.bf16 %v249, %v249
        %v251 = vld [vmem:[#allocation6] sm:$0xff]
        %v252 = vld [vmem:[#allocation6 + $0x8] sm:$0xff]
        %v253 = vld [vmem:[#allocation6 + $0x10] sm:$0xff]
        %v254 = vld [vmem:[#allocation6 + $0x18] sm:$0xff]
        %v255 = vpack.c.bf16 %v252, %v251
        %v256 = vpack.c.bf16 %v254, %v253
        %vm257 = vcmask 261120
        %v259 = vsel %vm257, %v250, 0
        %261 = vmatpush.bf16.msra.mxu0 0
        %262 = vmatpush.bf16.msra.mxu0 0
        %263 = vmatpush.bf16.msra.mxu0 0
        %264 = vmatpush.bf16.msra.mxu0 0
        %265 = vmatpush.bf16.msra.mxu0 0
        %266 = vmatpush.bf16.msra.mxu0 0
        %267 = vmatpush.bf16.msra.mxu0 %v256
        %268 = vmatpush.bf16.msra.mxu0 %v255
        %269 = vmatmul.bf16.gmra.mxu0 %v259
        %v270 = vpop.f32.mrf.mxu0
        %v271 = vadd.f32 0.0, %v270
        %v272 = vpop.f32.mrf.mxu0
        %273 = vdwg.mxu0
        %v274 = vadd.f32 %v248, %v271
        %275 = vst.msk [vmem:[#allocation2] sm:$0xff] %vm257, %v274
        // Predicated region
        $region45: #{tpu_custom_call.1} parent=31 // pred_check
          %p276 = pneg %p242
        $region46: #{tpu_custom_call.1} parent=31 // pred_check_branch
          %278 = sbr.rel (%p276) target = $region48
        $region47: #{tpu_custom_call.1} parent=31 // pred_region
          %v279 = vld [vmem:[#allocation2] sm:$0xff]
          %v280 = vld [vmem:[%s2] sm:$0x1]
          %v282 = vperm.slane %v280, 0
          %v284 = vadd.f32 %v279, %v282
          %v285 = vpack.c.bf16 %v284, %v284
          %vm286 = vcmask 60416
          %287 = vst.msk [vmem:[%s239] sm:$0xf] %vm286, %v285
          %289 = vrot.lane.b32.xlu0 %v285, 120
          %v290 = vpop.permute.xlu0 %289
          %s292 = scalar_lea.vmem %s239, 4 [#allocation8]
          %293 = vst.msk [vmem:[%s292] sm:$0xf] %vm286, %v290
          %294 = vrot.lane.b32.xlu0 %v285, 112
          %v295 = vpop.permute.xlu0 %294
          %s297 = scalar_lea.vmem %s239, 8 [#allocation8]
          %298 = vst.msk [vmem:[%s297] sm:$0xf] %vm286, %v295
          %299 = vrot.lane.b32.xlu0 %v285, 104
          %v300 = vpop.permute.xlu0 %299
          %s302 = scalar_lea.vmem %s239, 12 [#allocation8]
          %303 = vst.msk [vmem:[%s302] sm:$0xf] %vm286, %v300
        $region48: #{tpu_custom_call.1} parent=31 // pred_fallthru
          _
        %s304 = sand.u32 %s127, 1
        %s305 = scalar_lea.sflag [#allocation5], %s304
        %s306 = sand.u32 %s127, 1
        %s307 = smul.addr %s306, 16
        %s308 = scalar_lea.vmem [#allocation8], %s307
        // Predicated region
        $region49: #{tpu_custom_call.1} parent=31 // pred_check
          %p309 = pneg %p137
        $region50: #{tpu_custom_call.1} parent=31 // pred_check_branch
          %311 = sbr.rel (%p309) target = $region52
        $region51: #{tpu_custom_call.1} parent=31 // pred_region
          %313 = vsyncadd %s305, 0
          %s314 = smul.addr %s26, 4
          %s315 = sadd.s32 %s27, %s314
          %s316 = smul.addr %s315, 4
          %s317 = scalar_lea.hbm %s3, %s316
          %s318 = sshll.u32 %s308, 4
          %s319 = int_to_ptr.vmem [resolvable:$true] %s318
          %s320 = sshll.u32 %s317, 4
          %s321 = int_to_ptr.hbm [resolvable:$true] %s320
          %326 = dma.vmem_to_hbm [thread:$0]  %s319, 256, %s321, %s305, 64, 64, 4
        $region52: #{tpu_custom_call.1} parent=31 // pred_fallthru
          _
      $region32: #{tpu_custom_call.1} parent=5 // pred_fallthru
        _
      %p327 = scmp.le.s32.totalorder 2, %s16
      // Predicated region
      $region53: #{tpu_custom_call.1} parent=5 // pred_check
        %p328 = pneg %p327
      $region54: #{tpu_custom_call.1} parent=5 // pred_check_branch
        %330 = sbr.rel (%p328) target = $region56
      $region55: #{tpu_custom_call.1} parent=5 // pred_region
        %s331 = ssub.s32 %s16, 2
        // Predicated region
        $region57: #{tpu_custom_call.1} parent=55 // pred_check
          %p332 = pneg %p143
        $region58: #{tpu_custom_call.1} parent=55 // pred_check_branch
          %334 = sbr.rel (%p332) target = $region60
        $region59: #{tpu_custom_call.1} parent=55 // pred_region
          %s335 = sand.u32 %s128, 1
          %s336 = scalar_lea.sflag [#allocation5], %s335
          %s337 = sand.u32 %s128, 1
          %s338 = smul.addr %s337, 16
          %s339 = scalar_lea.vmem [#allocation8], %s338
          %341 = dma.done %s336, 256
        $region60: #{tpu_custom_call.1} parent=55 // pred_fallthru
          _
      $region56: #{tpu_custom_call.1} parent=5 // pred_fallthru
        _
    $region6: #{tpu_custom_call.1} parent=1 // loop_footer
      %s20 = sadd.s32 1, %s16
    $region7: #{tpu_custom_call.1} parent=1 // loop_footer_branch
      %15 = sbr.rel target = $region3
    $region8: #{tpu_custom_call.1} parent=1 // loop_exit
      _
    %342 = vsyncpa [#allocation4], 1
    %s343 = scalar_lea.sflag [#allocation4], 1
    %344 = vsyncpa %s343, 1
    %345 = vsyncpa [#allocation7], 1
    %346 = vsyncpa [#allocation5], 1
    %s347 = scalar_lea.sflag [#allocation5], 1
    %348 = vsyncpa %s347, 1

</llo_original>
